<compile_context>
chip_gen: v5e
topology: v5e:2x2
jax: 0.10.0
libtpu: 0.0.40
codegen_flags: <defaults>
</compile_context>

<pallas_src>
import functools

import jax
import jax.numpy as jnp
from jax import lax
from jax.experimental import pallas as pl
from jax.experimental.pallas import tpu as pltpu


def _round_up(x, m):
    return ((x + m - 1) // m) * m


def _pairwise_loss_kernel(
    bi_ref,          # (T,) int32 SMEM  — block-row index per triangle step
    bj_ref,          # (T,) int32 SMEM  — block-col index per triangle step
    probs_i_ref,     # (tile, L) VMEM   — "i" side rows of (N_pad, L)
    labels_i_ref,    # (tile, L) VMEM
    probs_jt_ref,    # (L, tile) VMEM   — "j" side, transposed (lane-dense)
    labels_jt_ref,   # (L, tile) VMEM
    w_ref,           # (1, L)    VMEM   — per-label loss weights
    out_ref,         # (1, 1, 1) block of (T, 1, 1) per-block partial sums
    *,
    sigma,
    n,
    n_pad,
    num_labels,
    tile,
    strip,
):
    t = pl.program_id(0)
    bi = bi_ref[t]
    bj = bj_ref[t]

    padded = n_pad != n          # static
    num_strips = tile // strip   # static
    f32 = jnp.float32
    sig = f32(sigma)
    # clip(x, -50, 50) * sigma == clip(sigma * x, lo, hi) with sorted bounds.
    o_lo = f32(min(-50.0 * sigma, 50.0 * sigma))
    o_hi = f32(max(-50.0 * sigma, 50.0 * sigma))

    # Hoisted, pre-transformed j-side rank-1 factors (lane-dense).
    xj = probs_jt_ref[...].astype(f32)        # (L, tile)
    yj = labels_jt_ref[...].astype(f32)       # (L, tile)
    b_all = xj * sig                          # sigma * x_j
    pv_all = 0.5 * yj                         # 0.5 * y_j
    w = w_ref[...].astype(f32)                # (1, L)

    row_acc = jnp.zeros((1, tile), f32)       # per-column sums ("i" reduced away)

    for l in range(num_labels):               # L is small: unrolled label loop
        b_l = b_all[l:l + 1, :]               # (1, tile)   sigma * x_j
        pv_l = pv_all[l:l + 1, :]             # (1, tile)   0.5 * y_j
        yj_l = yj[l:l + 1, :]                 # (1, tile)   raw labels (tie mask)
        w_l = w[0:1, l:l + 1]                 # (1, 1)

        def strip_body(s, acc, _l=l, _b=b_l, _pv=pv_l, _yj=yj_l):
            r0 = pl.multiple_of(s * strip, strip)
            xi_s = probs_i_ref[pl.ds(r0, strip), _l:_l + 1].astype(f32)   # (strip, 1)
            yi_s = labels_i_ref[pl.ds(r0, strip), _l:_l + 1].astype(f32)  # (strip, 1)
            a_s = xi_s * sig                      # sigma * x_i     (strip, 1)
            pu_s = 0.5 + 0.5 * yi_s               # 0.5 + 0.5*y_i   (strip, 1)

            # All tile^2-sized temporaries below are only (strip, tile).
            o_s = jnp.clip(a_s - _b, o_lo, o_hi)                 # sigma*(xi - xj), clipped
            p = jnp.clip(pu_s - _pv, 1e-10, 1.0 - 1e-10)
            # Stable softplus: log(1+exp(x)) = max(x,0) + log(1+exp(-|x|)).
            sp = jnp.maximum(o_s, 0.0) + jnp.log(1.0 + jnp.exp(-jnp.abs(o_s)))
            elem = sp - p * o_s

            keep = yi_s != _yj                                   # tie pairs drop out
            if padded:  # static branch: mask padded "i" rows (rank-1 factor)
                rows = bi * tile + r0 + lax.broadcasted_iota(jnp.int32, (strip, 1), 0)
                keep = jnp.logical_and(keep, rows < n)
            contrib = jnp.where(keep, elem, 0.0)
            # Immediate sublane (i) reduction -> (1, tile); rides the XLU.
            return acc + jnp.sum(contrib, axis=0, keepdims=True)

        row_l = lax.fori_loop(0, num_strips, strip_body,
                              jnp.zeros((1, tile), f32),
                              unroll=min(num_strips, 8))
        row_acc = row_acc + w_l * row_l        # per-label weight on the reduced row

    if padded:  # j-side validity applied once, after all reductions over i / labels
        cols = bj * tile + lax.broadcasted_iota(jnp.int32, (1, tile), 1)
        row_acc = jnp.where(cols < n, row_acc, 0.0)

    # Symmetry accounting: f(-o, 1-p) == f(o, p), so skipped lower-triangle
    # blocks are represented by doubling their upper mirrors; diagonal blocks
    # contain both orderings (i == j drops out via the tie mask).  The final
    # 0.5 / num_labels is applied outside on the summed partials.
    scale = jnp.where(bi == bj, f32(1.0), f32(2.0))
    total = jnp.sum(row_acc, axis=1, keepdims=True)              # (1, 1) lane reduce
    out_ref[0] = total * scale


def pairwise_loss(probs, labels, label_weights, learn2rank_sigma, *,
                  max_tile=256, strip=8):
    """Forward pass of PairwiseLoss.forward(input=probs, target=labels)."""
    n, num_labels = probs.shape
    assert labels.shape == (n, num_labels)
    assert max_tile % 128 == 0 and max_tile % strip == 0

    if n <= max_tile:
        tile = _round_up(n, strip)   # single block == full (padded) extents
        n_pad = tile
    else:
        tile = max_tile
        n_pad = _round_up(n, tile)
    nb = n_pad // tile

    if n_pad != n:
        pad = ((0, n_pad - n), (0, 0))
        probs_p = jnp.pad(probs, pad)
        labels_p = jnp.pad(labels, pad)
    else:
        probs_p, labels_p = probs, labels

    # Lane-dense layout for the "j" side of each pair: instances on lanes.
    probs_t = probs_p.T      # (L, N_pad)
    labels_t = labels_p.T    # (L, N_pad)

    w2d = jnp.asarray(label_weights, jnp.float32).reshape(1, num_labels)

    # Upper-triangle block enumeration (bi <= bj), row-major so the i-side
    # block index is constant over runs of steps (its refetch is skipped).
    bi_list, bj_list = [], []
    for bi in range(nb):
        for bj in range(bi, nb):
            bi_list.append(bi)
            bj_list.append(bj)
    n_blocks = len(bi_list)
    bi_arr = jnp.asarray(bi_list, jnp.int32)
    bj_arr = jnp.asarray(bj_list, jnp.int32)

    itemsize = jnp.dtype(probs_p.dtype).itemsize
    pairs = (n * (n - 1)) // 2
    cost = pl.CostEstimate(
        flops=int(16 * pairs * num_labels),
        transcendentals=int(2 * pairs * num_labels),
        bytes_accessed=int(4 * n_blocks * tile * num_labels * itemsize
                           + 8 * n_blocks + 4 * n_blocks + 4 * num_labels),
    )

    kernel = functools.partial(
        _pairwise_loss_kernel,
        sigma=float(learn2rank_sigma),
        n=n,
        n_pad=n_pad,
        num_labels=num_labels,
        tile=tile,
        strip=strip,
    )

    partials = pl.pallas_call(
        kernel,
        out_shape=jax.ShapeDtypeStruct((n_blocks, 1, 1), jnp.float32),
        grid_spec=pltpu.PrefetchScalarGridSpec(
            num_scalar_prefetch=2,
            grid=(n_blocks,),
            in_specs=[
                pl.BlockSpec((tile, num_labels), lambda t, bi, bj: (bi[t], 0)),
                pl.BlockSpec((tile, num_labels), lambda t, bi, bj: (bi[t], 0)),
                pl.BlockSpec((num_labels, tile), lambda t, bi, bj: (0, bj[t])),
                pl.BlockSpec((num_labels, tile), lambda t, bi, bj: (0, bj[t])),
                pl.BlockSpec((1, num_labels), lambda t, bi, bj: (0, 0)),
            ],
            out_specs=pl.BlockSpec((1, 1, 1), lambda t, bi, bj: (t, 0, 0)),
        ),
        compiler_params=pltpu.CompilerParams(
            dimension_semantics=("parallel",),   # equal-work steps: balanced on v7x
        ),
        cost_estimate=cost,
    )(bi_arr, bj_arr, probs_p, labels_p, probs_t, labels_t, w2d)

    # Every unordered pair was counted exactly twice overall.
    return jnp.sum(partials) * jnp.float32(0.5 / num_labels)


def pairwise_loss_ref(probs, labels, label_weights, sigma):
    """Vectorized pure-JAX reference mirroring the PyTorch i<j pair loop."""
    n, l = probs.shape
    probs = probs.astype(jnp.float32)
    labels = labels.astype(jnp.float32)
    w = jnp.asarray(label_weights, jnp.float32)

    o = probs[:, None, :] - probs[None, :, :]                   # (N, N, L)
    p = 0.5 * (1.0 + labels[:, None, :] - labels[None, :, :])   # (N, N, L)
    p = jnp.clip(p, 1e-10, 1.0 - 1e-10)
    o = jnp.clip(o, -50.0, 50.0)
    ii = jnp.arange(n)[:, None, None]
    jj = jnp.arange(n)[None, :, None]
    mask = jnp.logical_and(ii < jj, p != 0.5)
    o_s = o * sigma
    elem = (-p * o_s + jnp.log(1.0 + jnp.exp(o_s))) * w[None, None, :]
    return jnp.sum(jnp.where(mask, elem, 0.0)) / l


if __name__ == "__main__":
    key = jax.random.PRNGKey(0)
    k1, k2 = jax.random.split(key)

    # Case 1: module-sized toy config — 8 instances, 4 labels (28 pairs).
    N, L = 8, 4
    learn2rank_sigma = 1.0
    label_weights = jnp.array([1.0, 2.0, 0.5, 1.5], dtype=jnp.float32)
    probs = jax.random.uniform(k1, (N, L), dtype=jnp.float32)           # model scores
    labels = jax.random.bernoulli(k2, 0.5, (N, L)).astype(jnp.float32)  # binary targets

    loss = jax.block_until_ready(
        pairwise_loss(probs, labels, label_weights, learn2rank_sigma))
    ref = pairwise_loss_ref(probs, labels, label_weights, learn2rank_sigma)
    assert jnp.allclose(loss, ref, rtol=1e-4, atol=1e-4), (loss, ref)

    # Case 2: exercises the triangular block grid, padding masks, and the x2
    # off-diagonal accounting (tile=128 -> blocks (0,0),(0,1),(1,1); N=200
    # padded to 256).
    k3, k4 = jax.random.split(k1)
    N2, L2 = 200, 3
    w2 = jnp.array([0.7, 1.3, 1.0], dtype=jnp.float32)
    probs2 = jax.random.uniform(k3, (N2, L2), dtype=jnp.float32)
    labels2 = jax.random.bernoulli(k4, 0.5, (N2, L2)).astype(jnp.float32)

    loss2 = jax.block_until_ready(
        pairwise_loss(probs2, labels2, w2, 1.5, max_tile=128))
    ref2 = pairwise_loss_ref(probs2, labels2, w2, 1.5)
    assert jnp.allclose(loss2, ref2, rtol=1e-4, atol=1e-3), (loss2, ref2)

    # TODO(synk): the torch NaN-debug printing inside forward is intentionally omitted.
    print("KERNEL_OK")
</pallas_src>

<mosaic_0001>
module attributes {stable_mosaic.version = 11 : i64} {
  func.func @_pairwise_loss_kernel(%arg0: i32, %arg1: memref<1xi32, #tpu.memory_space<smem>>, %arg2: memref<1xi32, #tpu.memory_space<smem>>, %arg3: memref<8x4xf32, #tpu.memory_space<vmem>>, %arg4: memref<8x4xf32, #tpu.memory_space<vmem>>, %arg5: memref<4x8xf32, #tpu.memory_space<vmem>>, %arg6: memref<4x8xf32, #tpu.memory_space<vmem>>, %arg7: memref<1x4xf32, #tpu.memory_space<vmem>>, %arg8: memref<1x1x1xf32, #tpu.memory_space<vmem>>) attributes {dimension_semantics = [#tpu.dimension_semantics<parallel>], iteration_bounds = array<i64: 1>, scalar_prefetch = 2 : i64, scratch_operands = 0 : i64, tpu.core_type = #tpu.core_type<tc>, window_params = [{transform_indices = @transform_0, window_bounds = array<i64: 8, 4>}, {transform_indices = @transform_1, window_bounds = array<i64: 8, 4>}, {transform_indices = @transform_2, window_bounds = array<i64: 4, 8>}, {transform_indices = @transform_3, window_bounds = array<i64: 4, 8>}, {pipeline_mode = #tpu.pipeline_mode<synchronous>, transform_indices = @transform_4, window_bounds = array<i64: 1, 4>}, {transform_indices = @transform_5, window_bounds = array<i64: 1, 1, 1>}]} {
    %0 = arith.index_cast %arg0 : i32 to index
    %1 = memref.load %arg1[%0] : memref<1xi32, #tpu.memory_space<smem>>
    %2 = arith.index_cast %arg0 : i32 to index
    %3 = memref.load %arg2[%2] : memref<1xi32, #tpu.memory_space<smem>>
    %c0 = arith.constant 0 : index
    %c0_0 = arith.constant 0 : index
    %4 = vector.load %arg5[%c0, %c0_0] : memref<4x8xf32, #tpu.memory_space<vmem>>, vector<4x8xf32>
    %c0_1 = arith.constant 0 : index
    %c0_2 = arith.constant 0 : index
    %5 = vector.load %arg6[%c0_1, %c0_2] : memref<4x8xf32, #tpu.memory_space<vmem>>, vector<4x8xf32>
    %cst = arith.constant 1.000000e+00 : f32
    %6 = vector.broadcast %cst : f32 to vector<4x8xf32>
    %7 = arith.mulf %4, %6 : vector<4x8xf32>
    %cst_3 = arith.constant 5.000000e-01 : f32
    %8 = vector.broadcast %cst_3 : f32 to vector<4x8xf32>
    %9 = arith.mulf %8, %5 : vector<4x8xf32>
    %c0_4 = arith.constant 0 : index
    %c0_5 = arith.constant 0 : index
    %10 = vector.load %arg7[%c0_4, %c0_5] : memref<1x4xf32, #tpu.memory_space<vmem>>, vector<1x4xf32>
    %cst_6 = arith.constant 0.000000e+00 : f32
    %11 = vector.broadcast %cst_6 : f32 to vector<1x8xf32>
    %12 = vector.extract_strided_slice %7 {offsets = [0, 0], sizes = [1, 8], strides = [1, 1]} : vector<4x8xf32> to vector<1x8xf32>
    %13 = vector.extract_strided_slice %9 {offsets = [0, 0], sizes = [1, 8], strides = [1, 1]} : vector<4x8xf32> to vector<1x8xf32>
    %14 = vector.extract_strided_slice %5 {offsets = [0, 0], sizes = [1, 8], strides = [1, 1]} : vector<4x8xf32> to vector<1x8xf32>
    %15 = vector.extract_strided_slice %10 {offsets = [0, 0], sizes = [1, 1], strides = [1, 1]} : vector<1x4xf32> to vector<1x1xf32>
    %cst_7 = arith.constant 0.000000e+00 : f32
    %16 = vector.broadcast %cst_7 : f32 to vector<1x8xf32>
    %cst_8 = arith.constant 1.000000e+00 : f32
    %cst_9 = arith.constant -5.000000e+01 : f32
    %cst_10 = arith.constant 5.000000e+01 : f32
    %c0_i32 = arith.constant 0 : i32
    %c8_i32 = arith.constant 8 : i32
    %17 = arith.muli %c0_i32, %c8_i32 : i32
    %18 = tpu.assume_multiple %17, 8 : i32
    %19 = arith.index_cast %18 : i32 to index
    %c0_11 = arith.constant 0 : index
    %20 = vector.load %arg3[%19, %c0_11] : memref<8x4xf32, #tpu.memory_space<vmem>>, vector<8x1xf32>
    %21 = arith.index_cast %18 : i32 to index
    %c0_12 = arith.constant 0 : index
    %22 = vector.load %arg4[%21, %c0_12] : memref<8x4xf32, #tpu.memory_space<vmem>>, vector<8x1xf32>
    %23 = vector.broadcast %cst_8 : f32 to vector<8x1xf32>
    %24 = arith.mulf %20, %23 : vector<8x1xf32>
    %cst_13 = arith.constant 5.000000e-01 : f32
    %25 = vector.broadcast %cst_13 : f32 to vector<8x1xf32>
    %26 = arith.mulf %25, %22 : vector<8x1xf32>
    %cst_14 = arith.constant 5.000000e-01 : f32
    %27 = vector.broadcast %cst_14 : f32 to vector<8x1xf32>
    %28 = arith.addf %27, %26 : vector<8x1xf32>
    %29 = vector.broadcast %24 : vector<8x1xf32> to vector<8x8xf32>
    %30 = vector.broadcast %12 : vector<1x8xf32> to vector<8x8xf32>
    %31 = arith.subf %29, %30 : vector<8x8xf32>
    %32 = vector.broadcast %cst_9 : f32 to vector<8x8xf32>
    %33 = arith.maximumf %32, %31 : vector<8x8xf32>
    %34 = vector.broadcast %cst_10 : f32 to vector<8x8xf32>
    %35 = arith.minimumf %34, %33 : vector<8x8xf32>
    %36 = vector.broadcast %28 : vector<8x1xf32> to vector<8x8xf32>
    %37 = vector.broadcast %13 : vector<1x8xf32> to vector<8x8xf32>
    %38 = arith.subf %36, %37 : vector<8x8xf32>
    %cst_15 = arith.constant 1.000000e-10 : f32
    %cst_16 = arith.constant 1.000000e+00 : f32
    %39 = vector.broadcast %cst_15 : f32 to vector<8x8xf32>
    %40 = arith.maximumf %39, %38 : vector<8x8xf32>
    %41 = vector.broadcast %cst_16 : f32 to vector<8x8xf32>
    %42 = arith.minimumf %41, %40 : vector<8x8xf32>
    %cst_17 = arith.constant 0.000000e+00 : f32
    %43 = vector.broadcast %cst_17 : f32 to vector<8x8xf32>
    %44 = arith.maximumf %35, %43 : vector<8x8xf32>
    %45 = math.absf %35 : vector<8x8xf32>
    %cst_18 = arith.constant 0.000000e+00 : f32
    %46 = vector.broadcast %cst_18 : f32 to vector<8x8xf32>
    %47 = arith.subf %46, %45 : vector<8x8xf32>
    %48 = math.exp %47 : vector<8x8xf32>
    %cst_19 = arith.constant 1.000000e+00 : f32
    %49 = vector.broadcast %cst_19 : f32 to vector<8x8xf32>
    %50 = arith.addf %49, %48 : vector<8x8xf32>
    %51 = math.log %50 : vector<8x8xf32>
    %52 = arith.addf %44, %51 : vector<8x8xf32>
    %53 = arith.mulf %42, %35 : vector<8x8xf32>
    %54 = arith.subf %52, %53 : vector<8x8xf32>
    %55 = vector.broadcast %22 : vector<8x1xf32> to vector<8x8xf32>
    %56 = vector.broadcast %14 : vector<1x8xf32> to vector<8x8xf32>
    %57 = arith.cmpf one, %55, %56 : vector<8x8xf32>
    %cst_20 = arith.constant 0.000000e+00 : f32
    %58 = vector.broadcast %cst_20 : f32 to vector<8x8xf32>
    %59 = arith.select %57, %54, %58 : vector<8x8xi1>, vector<8x8xf32>
    %cst_21 = arith.constant dense<0.000000e+00> : vector<8xf32>
    %60 = vector.multi_reduction <add>, %59, %cst_21 [0] : vector<8x8xf32> to vector<8xf32>
    %61 = vector.shape_cast %60 : vector<8xf32> to vector<1x8xf32>
    %62 = arith.addf %16, %61 : vector<1x8xf32>
    %c1_i32 = arith.constant 1 : i32
    %63 = vector.broadcast %15 : vector<1x1xf32> to vector<1x8xf32>
    %64 = arith.mulf %63, %62 : vector<1x8xf32>
    %65 = arith.addf %11, %64 : vector<1x8xf32>
    %66 = vector.extract_strided_slice %7 {offsets = [1, 0], sizes = [1, 8], strides = [1, 1]} : vector<4x8xf32> to vector<1x8xf32>
    %67 = vector.extract_strided_slice %9 {offsets = [1, 0], sizes = [1, 8], strides = [1, 1]} : vector<4x8xf32> to vector<1x8xf32>
    %68 = vector.extract_strided_slice %5 {offsets = [1, 0], sizes = [1, 8], strides = [1, 1]} : vector<4x8xf32> to vector<1x8xf32>
    %69 = vector.extract_strided_slice %10 {offsets = [0, 1], sizes = [1, 1], strides = [1, 1]} : vector<1x4xf32> to vector<1x1xf32>
    %cst_22 = arith.constant 0.000000e+00 : f32
    %70 = vector.broadcast %cst_22 : f32 to vector<1x8xf32>
    %cst_23 = arith.constant 1.000000e+00 : f32
    %cst_24 = arith.constant -5.000000e+01 : f32
    %cst_25 = arith.constant 5.000000e+01 : f32
    %c0_i32_26 = arith.constant 0 : i32
    %c8_i32_27 = arith.constant 8 : i32
    %71 = arith.muli %c0_i32_26, %c8_i32_27 : i32
    %72 = tpu.assume_multiple %71, 8 : i32
    %73 = arith.index_cast %72 : i32 to index
    %c1 = arith.constant 1 : index
    %74 = vector.load %arg3[%73, %c1] : memref<8x4xf32, #tpu.memory_space<vmem>>, vector<8x1xf32>
    %75 = arith.index_cast %72 : i32 to index
    %c1_28 = arith.constant 1 : index
    %76 = vector.load %arg4[%75, %c1_28] : memref<8x4xf32, #tpu.memory_space<vmem>>, vector<8x1xf32>
    %77 = vector.broadcast %cst_23 : f32 to vector<8x1xf32>
    %78 = arith.mulf %74, %77 : vector<8x1xf32>
    %cst_29 = arith.constant 5.000000e-01 : f32
    %79 = vector.broadcast %cst_29 : f32 to vector<8x1xf32>
    %80 = arith.mulf %79, %76 : vector<8x1xf32>
    %cst_30 = arith.constant 5.000000e-01 : f32
    %81 = vector.broadcast %cst_30 : f32 to vector<8x1xf32>
    %82 = arith.addf %81, %80 : vector<8x1xf32>
    %83 = vector.broadcast %78 : vector<8x1xf32> to vector<8x8xf32>
    %84 = vector.broadcast %66 : vector<1x8xf32> to vector<8x8xf32>
    %85 = arith.subf %83, %84 : vector<8x8xf32>
    %86 = vector.broadcast %cst_24 : f32 to vector<8x8xf32>
    %87 = arith.maximumf %86, %85 : vector<8x8xf32>
    %88 = vector.broadcast %cst_25 : f32 to vector<8x8xf32>
    %89 = arith.minimumf %88, %87 : vector<8x8xf32>
    %90 = vector.broadcast %82 : vector<8x1xf32> to vector<8x8xf32>
    %91 = vector.broadcast %67 : vector<1x8xf32> to vector<8x8xf32>
    %92 = arith.subf %90, %91 : vector<8x8xf32>
    %cst_31 = arith.constant 1.000000e-10 : f32
    %cst_32 = arith.constant 1.000000e+00 : f32
    %93 = vector.broadcast %cst_31 : f32 to vector<8x8xf32>
    %94 = arith.maximumf %93, %92 : vector<8x8xf32>
    %95 = vector.broadcast %cst_32 : f32 to vector<8x8xf32>
    %96 = arith.minimumf %95, %94 : vector<8x8xf32>
    %cst_33 = arith.constant 0.000000e+00 : f32
    %97 = vector.broadcast %cst_33 : f32 to vector<8x8xf32>
    %98 = arith.maximumf %89, %97 : vector<8x8xf32>
    %99 = math.absf %89 : vector<8x8xf32>
    %cst_34 = arith.constant 0.000000e+00 : f32
    %100 = vector.broadcast %cst_34 : f32 to vector<8x8xf32>
    %101 = arith.subf %100, %99 : vector<8x8xf32>
    %102 = math.exp %101 : vector<8x8xf32>
    %cst_35 = arith.constant 1.000000e+00 : f32
    %103 = vector.broadcast %cst_35 : f32 to vector<8x8xf32>
    %104 = arith.addf %103, %102 : vector<8x8xf32>
    %105 = math.log %104 : vector<8x8xf32>
    %106 = arith.addf %98, %105 : vector<8x8xf32>
    %107 = arith.mulf %96, %89 : vector<8x8xf32>
    %108 = arith.subf %106, %107 : vector<8x8xf32>
    %109 = vector.broadcast %76 : vector<8x1xf32> to vector<8x8xf32>
    %110 = vector.broadcast %68 : vector<1x8xf32> to vector<8x8xf32>
    %111 = arith.cmpf one, %109, %110 : vector<8x8xf32>
    %cst_36 = arith.constant 0.000000e+00 : f32
    %112 = vector.broadcast %cst_36 : f32 to vector<8x8xf32>
    %113 = arith.select %111, %108, %112 : vector<8x8xi1>, vector<8x8xf32>
    %cst_37 = arith.constant dense<0.000000e+00> : vector<8xf32>
    %114 = vector.multi_reduction <add>, %113, %cst_37 [0] : vector<8x8xf32> to vector<8xf32>
    %115 = vector.shape_cast %114 : vector<8xf32> to vector<1x8xf32>
    %116 = arith.addf %70, %115 : vector<1x8xf32>
    %c1_i32_38 = arith.constant 1 : i32
    %117 = vector.broadcast %69 : vector<1x1xf32> to vector<1x8xf32>
    %118 = arith.mulf %117, %116 : vector<1x8xf32>
    %119 = arith.addf %65, %118 : vector<1x8xf32>
    %120 = vector.extract_strided_slice %7 {offsets = [2, 0], sizes = [1, 8], strides = [1, 1]} : vector<4x8xf32> to vector<1x8xf32>
    %121 = vector.extract_strided_slice %9 {offsets = [2, 0], sizes = [1, 8], strides = [1, 1]} : vector<4x8xf32> to vector<1x8xf32>
    %122 = vector.extract_strided_slice %5 {offsets = [2, 0], sizes = [1, 8], strides = [1, 1]} : vector<4x8xf32> to vector<1x8xf32>
    %123 = vector.extract_strided_slice %10 {offsets = [0, 2], sizes = [1, 1], strides = [1, 1]} : vector<1x4xf32> to vector<1x1xf32>
    %cst_39 = arith.constant 0.000000e+00 : f32
    %124 = vector.broadcast %cst_39 : f32 to vector<1x8xf32>
    %cst_40 = arith.constant 1.000000e+00 : f32
    %cst_41 = arith.constant -5.000000e+01 : f32
    %cst_42 = arith.constant 5.000000e+01 : f32
    %c0_i32_43 = arith.constant 0 : i32
    %c8_i32_44 = arith.constant 8 : i32
    %125 = arith.muli %c0_i32_43, %c8_i32_44 : i32
    %126 = tpu.assume_multiple %125, 8 : i32
    %127 = arith.index_cast %126 : i32 to index
    %c2 = arith.constant 2 : index
    %128 = vector.load %arg3[%127, %c2] : memref<8x4xf32, #tpu.memory_space<vmem>>, vector<8x1xf32>
    %129 = arith.index_cast %126 : i32 to index
    %c2_45 = arith.constant 2 : index
    %130 = vector.load %arg4[%129, %c2_45] : memref<8x4xf32, #tpu.memory_space<vmem>>, vector<8x1xf32>
    %131 = vector.broadcast %cst_40 : f32 to vector<8x1xf32>
    %132 = arith.mulf %128, %131 : vector<8x1xf32>
    %cst_46 = arith.constant 5.000000e-01 : f32
    %133 = vector.broadcast %cst_46 : f32 to vector<8x1xf32>
    %134 = arith.mulf %133, %130 : vector<8x1xf32>
    %cst_47 = arith.constant 5.000000e-01 : f32
    %135 = vector.broadcast %cst_47 : f32 to vector<8x1xf32>
    %136 = arith.addf %135, %134 : vector<8x1xf32>
    %137 = vector.broadcast %132 : vector<8x1xf32> to vector<8x8xf32>
    %138 = vector.broadcast %120 : vector<1x8xf32> to vector<8x8xf32>
    %139 = arith.subf %137, %138 : vector<8x8xf32>
    %140 = vector.broadcast %cst_41 : f32 to vector<8x8xf32>
    %141 = arith.maximumf %140, %139 : vector<8x8xf32>
    %142 = vector.broadcast %cst_42 : f32 to vector<8x8xf32>
    %143 = arith.minimumf %142, %141 : vector<8x8xf32>
    %144 = vector.broadcast %136 : vector<8x1xf32> to vector<8x8xf32>
    %145 = vector.broadcast %121 : vector<1x8xf32> to vector<8x8xf32>
    %146 = arith.subf %144, %145 : vector<8x8xf32>
    %cst_48 = arith.constant 1.000000e-10 : f32
    %cst_49 = arith.constant 1.000000e+00 : f32
    %147 = vector.broadcast %cst_48 : f32 to vector<8x8xf32>
    %148 = arith.maximumf %147, %146 : vector<8x8xf32>
    %149 = vector.broadcast %cst_49 : f32 to vector<8x8xf32>
    %150 = arith.minimumf %149, %148 : vector<8x8xf32>
    %cst_50 = arith.constant 0.000000e+00 : f32
    %151 = vector.broadcast %cst_50 : f32 to vector<8x8xf32>
    %152 = arith.maximumf %143, %151 : vector<8x8xf32>
    %153 = math.absf %143 : vector<8x8xf32>
    %cst_51 = arith.constant 0.000000e+00 : f32
    %154 = vector.broadcast %cst_51 : f32 to vector<8x8xf32>
    %155 = arith.subf %154, %153 : vector<8x8xf32>
    %156 = math.exp %155 : vector<8x8xf32>
    %cst_52 = arith.constant 1.000000e+00 : f32
    %157 = vector.broadcast %cst_52 : f32 to vector<8x8xf32>
    %158 = arith.addf %157, %156 : vector<8x8xf32>
    %159 = math.log %158 : vector<8x8xf32>
    %160 = arith.addf %152, %159 : vector<8x8xf32>
    %161 = arith.mulf %150, %143 : vector<8x8xf32>
    %162 = arith.subf %160, %161 : vector<8x8xf32>
    %163 = vector.broadcast %130 : vector<8x1xf32> to vector<8x8xf32>
    %164 = vector.broadcast %122 : vector<1x8xf32> to vector<8x8xf32>
    %165 = arith.cmpf one, %163, %164 : vector<8x8xf32>
    %cst_53 = arith.constant 0.000000e+00 : f32
    %166 = vector.broadcast %cst_53 : f32 to vector<8x8xf32>
    %167 = arith.select %165, %162, %166 : vector<8x8xi1>, vector<8x8xf32>
    %cst_54 = arith.constant dense<0.000000e+00> : vector<8xf32>
    %168 = vector.multi_reduction <add>, %167, %cst_54 [0] : vector<8x8xf32> to vector<8xf32>
    %169 = vector.shape_cast %168 : vector<8xf32> to vector<1x8xf32>
    %170 = arith.addf %124, %169 : vector<1x8xf32>
    %c1_i32_55 = arith.constant 1 : i32
    %171 = vector.broadcast %123 : vector<1x1xf32> to vector<1x8xf32>
    %172 = arith.mulf %171, %170 : vector<1x8xf32>
    %173 = arith.addf %119, %172 : vector<1x8xf32>
    %174 = vector.extract_strided_slice %7 {offsets = [3, 0], sizes = [1, 8], strides = [1, 1]} : vector<4x8xf32> to vector<1x8xf32>
    %175 = vector.extract_strided_slice %9 {offsets = [3, 0], sizes = [1, 8], strides = [1, 1]} : vector<4x8xf32> to vector<1x8xf32>
    %176 = vector.extract_strided_slice %5 {offsets = [3, 0], sizes = [1, 8], strides = [1, 1]} : vector<4x8xf32> to vector<1x8xf32>
    %177 = vector.extract_strided_slice %10 {offsets = [0, 3], sizes = [1, 1], strides = [1, 1]} : vector<1x4xf32> to vector<1x1xf32>
    %cst_56 = arith.constant 0.000000e+00 : f32
    %178 = vector.broadcast %cst_56 : f32 to vector<1x8xf32>
    %cst_57 = arith.constant 1.000000e+00 : f32
    %cst_58 = arith.constant -5.000000e+01 : f32
    %cst_59 = arith.constant 5.000000e+01 : f32
    %c0_i32_60 = arith.constant 0 : i32
    %c8_i32_61 = arith.constant 8 : i32
    %179 = arith.muli %c0_i32_60, %c8_i32_61 : i32
    %180 = tpu.assume_multiple %179, 8 : i32
    %181 = arith.index_cast %180 : i32 to index
    %c3 = arith.constant 3 : index
    %182 = vector.load %arg3[%181, %c3] : memref<8x4xf32, #tpu.memory_space<vmem>>, vector<8x1xf32>
    %183 = arith.index_cast %180 : i32 to index
    %c3_62 = arith.constant 3 : index
    %184 = vector.load %arg4[%183, %c3_62] : memref<8x4xf32, #tpu.memory_space<vmem>>, vector<8x1xf32>
    %185 = vector.broadcast %cst_57 : f32 to vector<8x1xf32>
    %186 = arith.mulf %182, %185 : vector<8x1xf32>
    %cst_63 = arith.constant 5.000000e-01 : f32
    %187 = vector.broadcast %cst_63 : f32 to vector<8x1xf32>
    %188 = arith.mulf %187, %184 : vector<8x1xf32>
    %cst_64 = arith.constant 5.000000e-01 : f32
    %189 = vector.broadcast %cst_64 : f32 to vector<8x1xf32>
    %190 = arith.addf %189, %188 : vector<8x1xf32>
    %191 = vector.broadcast %186 : vector<8x1xf32> to vector<8x8xf32>
    %192 = vector.broadcast %174 : vector<1x8xf32> to vector<8x8xf32>
    %193 = arith.subf %191, %192 : vector<8x8xf32>
    %194 = vector.broadcast %cst_58 : f32 to vector<8x8xf32>
    %195 = arith.maximumf %194, %193 : vector<8x8xf32>
    %196 = vector.broadcast %cst_59 : f32 to vector<8x8xf32>
    %197 = arith.minimumf %196, %195 : vector<8x8xf32>
    %198 = vector.broadcast %190 : vector<8x1xf32> to vector<8x8xf32>
    %199 = vector.broadcast %175 : vector<1x8xf32> to vector<8x8xf32>
    %200 = arith.subf %198, %199 : vector<8x8xf32>
    %cst_65 = arith.constant 1.000000e-10 : f32
    %cst_66 = arith.constant 1.000000e+00 : f32
    %201 = vector.broadcast %cst_65 : f32 to vector<8x8xf32>
    %202 = arith.maximumf %201, %200 : vector<8x8xf32>
    %203 = vector.broadcast %cst_66 : f32 to vector<8x8xf32>
    %204 = arith.minimumf %203, %202 : vector<8x8xf32>
    %cst_67 = arith.constant 0.000000e+00 : f32
    %205 = vector.broadcast %cst_67 : f32 to vector<8x8xf32>
    %206 = arith.maximumf %197, %205 : vector<8x8xf32>
    %207 = math.absf %197 : vector<8x8xf32>
    %cst_68 = arith.constant 0.000000e+00 : f32
    %208 = vector.broadcast %cst_68 : f32 to vector<8x8xf32>
    %209 = arith.subf %208, %207 : vector<8x8xf32>
    %210 = math.exp %209 : vector<8x8xf32>
    %cst_69 = arith.constant 1.000000e+00 : f32
    %211 = vector.broadcast %cst_69 : f32 to vector<8x8xf32>
    %212 = arith.addf %211, %210 : vector<8x8xf32>
    %213 = math.log %212 : vector<8x8xf32>
    %214 = arith.addf %206, %213 : vector<8x8xf32>
    %215 = arith.mulf %204, %197 : vector<8x8xf32>
    %216 = arith.subf %214, %215 : vector<8x8xf32>
    %217 = vector.broadcast %184 : vector<8x1xf32> to vector<8x8xf32>
    %218 = vector.broadcast %176 : vector<1x8xf32> to vector<8x8xf32>
    %219 = arith.cmpf one, %217, %218 : vector<8x8xf32>
    %cst_70 = arith.constant 0.000000e+00 : f32
    %220 = vector.broadcast %cst_70 : f32 to vector<8x8xf32>
    %221 = arith.select %219, %216, %220 : vector<8x8xi1>, vector<8x8xf32>
    %cst_71 = arith.constant dense<0.000000e+00> : vector<8xf32>
    %222 = vector.multi_reduction <add>, %221, %cst_71 [0] : vector<8x8xf32> to vector<8xf32>
    %223 = vector.shape_cast %222 : vector<8xf32> to vector<1x8xf32>
    %224 = arith.addf %178, %223 : vector<1x8xf32>
    %c1_i32_72 = arith.constant 1 : i32
    %225 = vector.broadcast %177 : vector<1x1xf32> to vector<1x8xf32>
    %226 = arith.mulf %225, %224 : vector<1x8xf32>
    %227 = arith.addf %173, %226 : vector<1x8xf32>
    %228 = arith.cmpi eq, %1, %3 : i32
    %cst_73 = arith.constant 1.000000e+00 : f32
    %cst_74 = arith.constant 2.000000e+00 : f32
    %229 = arith.select %228, %cst_73, %cst_74 : f32
    %cst_75 = arith.constant dense<0.000000e+00> : vector<1xf32>
    %230 = vector.multi_reduction <add>, %227, %cst_75 [1] : vector<1x8xf32> to vector<1xf32>
    %231 = vector.shape_cast %230 : vector<1xf32> to vector<1x1xf32>
    %232 = vector.broadcast %229 : f32 to vector<1x1xf32>
    %233 = arith.mulf %231, %232 : vector<1x1xf32>
    %c0_76 = arith.constant 0 : index
    %c0_77 = arith.constant 0 : index
    %c0_78 = arith.constant 0 : index
    %234 = vector.load %arg8[%c0_76, %c0_77, %c0_78] : memref<1x1x1xf32, #tpu.memory_space<vmem>>, vector<1x1x1xf32>
    %235 = vector.shape_cast %234 : vector<1x1x1xf32> to vector<1x1xf32>
    %236 = vector.shape_cast %233 : vector<1x1xf32> to vector<1x1x1xf32>
    tpu.vector_store %arg8[%c0_76, %c0_77, %c0_78], %236 {strides = array<i32>} : memref<1x1x1xf32, #tpu.memory_space<vmem>>, vector<1x1x1xf32>,
    return
  }
  func.func @transform_0(%arg0: i32, %arg1: memref<1xi32, #tpu.memory_space<smem>>, %arg2: memref<1xi32, #tpu.memory_space<smem>>) -> (i32, i32) {
    %0 = arith.index_cast %arg0 : i32 to index
    %1 = memref.load %arg1[%0] : memref<1xi32, #tpu.memory_space<smem>>
    %c0_i32 = arith.constant 0 : i32
    %c0_i32_0 = arith.constant 0 : i32
    return %1, %c0_i32 : i32, i32
  }
  func.func @transform_1(%arg0: i32, %arg1: memref<1xi32, #tpu.memory_space<smem>>, %arg2: memref<1xi32, #tpu.memory_space<smem>>) -> (i32, i32) {
    %0 = arith.index_cast %arg0 : i32 to index
    %1 = memref.load %arg1[%0] : memref<1xi32, #tpu.memory_space<smem>>
    %c0_i32 = arith.constant 0 : i32
    %c0_i32_0 = arith.constant 0 : i32
    return %1, %c0_i32 : i32, i32
  }
  func.func @transform_2(%arg0: i32, %arg1: memref<1xi32, #tpu.memory_space<smem>>, %arg2: memref<1xi32, #tpu.memory_space<smem>>) -> (i32, i32) {
    %0 = arith.index_cast %arg0 : i32 to index
    %1 = memref.load %arg2[%0] : memref<1xi32, #tpu.memory_space<smem>>
    %c0_i32 = arith.constant 0 : i32
    %c0_i32_0 = arith.constant 0 : i32
    return %c0_i32, %1 : i32, i32
  }
  func.func @transform_3(%arg0: i32, %arg1: memref<1xi32, #tpu.memory_space<smem>>, %arg2: memref<1xi32, #tpu.memory_space<smem>>) -> (i32, i32) {
    %0 = arith.index_cast %arg0 : i32 to index
    %1 = memref.load %arg2[%0] : memref<1xi32, #tpu.memory_space<smem>>
    %c0_i32 = arith.constant 0 : i32
    %c0_i32_0 = arith.constant 0 : i32
    return %c0_i32, %1 : i32, i32
  }
  func.func @transform_4(%arg0: i32, %arg1: memref<1xi32, #tpu.memory_space<smem>>, %arg2: memref<1xi32, #tpu.memory_space<smem>>) -> (i32, i32) {
    %c0_i32 = arith.constant 0 : i32
    %c0_i32_0 = arith.constant 0 : i32
    %c0_i32_1 = arith.constant 0 : i32
    return %c0_i32, %c0_i32_0 : i32, i32
  }
  func.func @transform_5(%arg0: i32, %arg1: memref<1xi32, #tpu.memory_space<smem>>, %arg2: memref<1xi32, #tpu.memory_space<smem>>) -> (i32, i32, i32) {
    %c0_i32 = arith.constant 0 : i32
    %c0_i32_0 = arith.constant 0 : i32
    %c0_i32_1 = arith.constant 0 : i32
    return %arg0, %c0_i32, %c0_i32_0 : i32, i32, i32
  }
}

</mosaic_0001>

<llo_original>
// kernel: tpu_custom_call.1
$region0: #{tpu_custom_call.1}
  #allocation0 [shape = 'u32[]', space=smem, size = 0x4, offset = 0x4, fixed_abs, tag = 'smem constant byte address 0x4 - core index']
  #allocation1 [shape = 'u32[72,128]{1,0:T(1,128)}', space=vmem, size = 0x9000, scoped, tag = 'internal scratch']
  #allocation2 [shape = 's32[1]{0}', space=sflag, size = 0x4, scoped, tag = 'scoped memory for tpu_custom_call.1']
  #allocation3 [shape = 's32[1]{0:T(128)S(6)}', space=smem, size = 0x200, scoped, tag = 'prefetched SMEM operand 0']
  #allocation4 [shape = 's32[1]{0:T(128)S(6)}', space=smem, size = 0x200, scoped, tag = 'prefetched SMEM operand 1']
  %s0 = inlined_call_operand.<no memory space> [shape: s32[1], index: 0, kind: input, shape index: {}]
  %s1 = inlined_call_operand.<no memory space> [shape: s32[1], index: 1, kind: input, shape index: {}]
  %s2 = inlined_call_operand.vmem [shape: f32[8,4], index: 2, kind: input, shape index: {}]
  %s3 = inlined_call_operand.vmem [shape: f32[8,4], index: 3, kind: input, shape index: {}]
  %s4 = inlined_call_operand.vmem [shape: f32[4,8], index: 4, kind: input, shape index: {}]
  %s5 = inlined_call_operand.vmem [shape: f32[4,8], index: 5, kind: input, shape index: {}]
  %s6 = inlined_call_operand.vmem [shape: f32[1,4], index: 6, kind: input, shape index: {}]
  %s7 = inlined_call_operand.hbm [shape: f32[1,1,1], index: 7, kind: output, shape index: {}]
  %s8 = sld [smem:[#allocation0]]
  $region30: #{tpu_custom_call.1} parent=0
    _
  %s10 = ssub.s32 1, %s8
  %s11 = scalar_select 0, %s10, %s8
  %12 = sst [smem:[#allocation3]] %s0
  %13 = sst [smem:[#allocation4]] %s1
  $region1: #{tpu_custom_call.1} parent=0
    #allocation5 [shape = 'u8[512]{0}', space=vmem, size = 0x400, scoped, tag = 'output window, operand 0, single buffered']
    #allocation6 [shape = 's32[1]{0}', space=sflag, size = 0x4, scoped, tag = 'scoped memory for tpu_custom_call.1']
    %14 = vsyncpa [#allocation6], 0
    // Predicated region
    $region2: #{tpu_custom_call.1} parent=1 // pred_check
      _
    $region3: #{tpu_custom_call.1} parent=1 // pred_check_branch
      %16 = sbr.rel (0) target = $region5
    $region4: #{tpu_custom_call.1} parent=1 // pred_region
      %s17 = sld [smem:[#allocation3]]
      %p18 = scmp.lt.s32.totalorder %s17, 0
      %s19 = scalar_select %p18, %s17, 0
      %s20 = smul.addr %s19, 8
      %s21 = scalar_lea.vmem %s2, %s20
      %s22 = sld [smem:[#allocation3]]
    $region5: #{tpu_custom_call.1} parent=1 // pred_fallthru
      _
    // Predicated region
    $region6: #{tpu_custom_call.1} parent=1 // pred_check
      _
    $region7: #{tpu_custom_call.1} parent=1 // pred_check_branch
      %24 = sbr.rel (0) target = $region9
    $region8: #{tpu_custom_call.1} parent=1 // pred_region
      %s25 = sld [smem:[#allocation3]]
      %p26 = scmp.lt.s32.totalorder %s25, 0
      %s27 = scalar_select %p26, %s25, 0
      %s28 = smul.addr %s27, 8
      %s29 = scalar_lea.vmem %s3, %s28
      %s30 = sld [smem:[#allocation3]]
    $region9: #{tpu_custom_call.1} parent=1 // pred_fallthru
      _
    // Predicated region
    $region10: #{tpu_custom_call.1} parent=1 // pred_check
      _
    $region11: #{tpu_custom_call.1} parent=1 // pred_check_branch
      %32 = sbr.rel (0) target = $region13
    $region12: #{tpu_custom_call.1} parent=1 // pred_region
      %s33 = sld [smem:[#allocation4]]
      %p34 = scmp.lt.s32.totalorder %s33, 0
      %s35 = scalar_select %p34, %s33, 0
      %s36 = smul.addr %s35, 4
      %s37 = scalar_lea.vmem %s4, %s36
      %s38 = sld [smem:[#allocation4]]
    $region13: #{tpu_custom_call.1} parent=1 // pred_fallthru
      _
    // Predicated region
    $region14: #{tpu_custom_call.1} parent=1 // pred_check
      _
    $region15: #{tpu_custom_call.1} parent=1 // pred_check_branch
      %40 = sbr.rel (0) target = $region17
    $region16: #{tpu_custom_call.1} parent=1 // pred_region
      %s41 = sld [smem:[#allocation4]]
      %p42 = scmp.lt.s32.totalorder %s41, 0
      %s43 = scalar_select %p42, %s41, 0
      %s44 = smul.addr %s43, 4
      %s45 = scalar_lea.vmem %s5, %s44
      %s46 = sld [smem:[#allocation4]]
    $region17: #{tpu_custom_call.1} parent=1 // pred_fallthru
      _
    // Predicated region
    $region18: #{tpu_custom_call.1} parent=1 // pred_check
      _
    $region19: #{tpu_custom_call.1} parent=1 // pred_check_branch
      %48 = sbr.rel (0) target = $region21
    $region20: #{tpu_custom_call.1} parent=1 // pred_region
      _
    $region21: #{tpu_custom_call.1} parent=1 // pred_fallthru
      _
    %s49 = sld [smem:[#allocation3]]
    %p50 = scmp.lt.s32.totalorder %s49, 0
    %s51 = scalar_select %p50, %s49, 0
    %s52 = smul.addr %s51, 8
    %s53 = scalar_lea.vmem %s2, %s52
    %s54 = sld [smem:[#allocation3]]
    %p55 = scmp.lt.s32.totalorder %s54, 0
    %s56 = scalar_select %p55, %s54, 0
    %s57 = smul.addr %s56, 8
    %s58 = scalar_lea.vmem %s3, %s57
    %s59 = sld [smem:[#allocation4]]
    %p60 = scmp.lt.s32.totalorder %s59, 0
    %s61 = scalar_select %p60, %s59, 0
    %s62 = smul.addr %s61, 4
    %s63 = scalar_lea.vmem %s4, %s62
    %s64 = sld [smem:[#allocation4]]
    %p65 = scmp.lt.s32.totalorder %s64, 0
    %s66 = scalar_select %p65, %s64, 0
    %s67 = smul.addr %s66, 4
    %s68 = scalar_lea.vmem %s5, %s67
    %s69 = sld [smem:[#allocation3]]
    %p70 = scmp.lt.s32.totalorder %s69, 0
    %s71 = scalar_select %p70, %s69, 0
    %s72 = smul.addr %s71, 8
    %s73 = scalar_lea.vmem %s2, %s72
    %s74 = sld [smem:[#allocation3]]
    %s75 = sld [smem:[#allocation3]]
    %p76 = scmp.lt.s32.totalorder %s75, 0
    %s77 = scalar_select %p76, %s75, 0
    %s78 = smul.addr %s77, 8
    %s79 = scalar_lea.vmem %s3, %s78
    %s80 = sld [smem:[#allocation3]]
    %s81 = sld [smem:[#allocation4]]
    %p82 = scmp.lt.s32.totalorder %s81, 0
    %s83 = scalar_select %p82, %s81, 0
    %s84 = smul.addr %s83, 4
    %s85 = scalar_lea.vmem %s4, %s84
    %s86 = sld [smem:[#allocation4]]
    %s87 = sld [smem:[#allocation4]]
    %p88 = scmp.lt.s32.totalorder %s87, 0
    %s89 = scalar_select %p88, %s87, 0
    %s90 = smul.addr %s89, 4
    %s91 = scalar_lea.vmem %s5, %s90
    %s92 = sld [smem:[#allocation4]]
    %s93 = sld [smem:[#allocation3]]
    %s94 = sld [smem:[#allocation4]]
    %v95 = vld [vmem:[%s85] sm:$0xf]
    %v96 = vld [vmem:[%s91] sm:$0xf]
    %v97 = vmul.f32 %v96, 0.5
    %v98 = vld [vmem:[%s6] sm:$0x1]
    %v99 = vld [vmem:[%s73] sm:$0xff]
    %v100 = vld [vmem:[%s79] sm:$0xff]
    %v101 = vmul.f32 %v100, 0.5
    %v102 = vadd.f32 %v101, 0.5
    %104 = vset.pattern.permute.xlu0 0
    %105 = vperm.xlu0 %104, %v99
    %v106 = vpop.permute.xlu0 %105
    %v108 = vperm.slane %v95, 0
    %v109 = vsub.f32 %v106, %v108
    %v110 = vmax.f32 %v109, -50.0
    %v111 = vmin.f32 %v110, 50.0
    %113 = vset.pattern.permute.xlu0 0
    %114 = vperm.xlu0 %113, %v102
    %v115 = vpop.permute.xlu0 %114
    %v117 = vperm.slane %v97, 0
    %v118 = vsub.f32 %v115, %v117
    %v119 = vmax.f32 %v118, 1e-10
    %v120 = vmin.f32 %v119, 1.0
    %v121 = vmax.f32 %v111, 0.0
    %v122 = vand.u32 2147483647, %v111
    %v123 = vsub.f32 0.0, %v122
    %v124 = vmul.f32 %v123, 1.442695
    %v125 = vpow.pop %v124
    %v126 = vadd.f32 %v125, 1.0
    %v127 = vlog2.pop %v126
    %v128 = vmul.f32 %v127, 0.6931472
    %v129 = vadd.f32 %v121, %v128
    %v130 = vmul.f32 %v120, %v111
    %v131 = vsub.f32 %v129, %v130
    %133 = vset.pattern.permute.xlu0 0
    %134 = vperm.xlu0 %133, %v100
    %v135 = vpop.permute.xlu0 %134
    %v137 = vperm.slane %v96, 0
    %vm138 = vcmp.ne.f32.partialorder %v135, %v137
    %v139 = vsel %vm138, %v131, 0.0
    %vm140 = vcmask 64512
    %v141 = vsel %vm140, %v139, 0.0
    %v142 = vrot.slane %v141, 4
    %v143 = vadd.f32 %v141, %v142
    %v144 = vrot.slane %v143, 2
    %v145 = vadd.f32 %v143, %v144
    %v146 = vrot.slane %v145, 1
    %v147 = vadd.f32 %v145, %v146
    %v148 = vadd.f32 %v147, 0.0
    %150 = vset.pattern.permute.xlu0 0
    %151 = vperm.xlu0 %150, %v98
    %v152 = vpop.permute.xlu0 %151
    %v154 = vperm.slane %v152, 0
    %v155 = vmul.f32 %v154, %v148
    %v156 = vadd.f32 %v155, 0.0
    %157 = vset.pattern.permute.xlu0 1
    %158 = vperm.xlu0 %157, %v99
    %v159 = vpop.permute.xlu0 %158
    %v161 = vperm.slane %v95, 1
    %v162 = vsub.f32 %v159, %v161
    %v163 = vmax.f32 %v162, -50.0
    %v164 = vmin.f32 %v163, 50.0
    %165 = vset.pattern.permute.xlu0 1
    %166 = vperm.xlu0 %165, %v102
    %v167 = vpop.permute.xlu0 %166
    %v169 = vperm.slane %v97, 1
    %v170 = vsub.f32 %v167, %v169
    %v171 = vmax.f32 %v170, 1e-10
    %v172 = vmin.f32 %v171, 1.0
    %v173 = vmax.f32 %v164, 0.0
    %v174 = vand.u32 2147483647, %v164
    %v175 = vsub.f32 0.0, %v174
    %v176 = vmul.f32 %v175, 1.442695
    %v177 = vpow.pop %v176
    %v178 = vadd.f32 %v177, 1.0
    %v179 = vlog2.pop %v178
    %v180 = vmul.f32 %v179, 0.6931472
    %v181 = vadd.f32 %v173, %v180
    %v182 = vmul.f32 %v172, %v164
    %v183 = vsub.f32 %v181, %v182
    %184 = vset.pattern.permute.xlu0 1
    %185 = vperm.xlu0 %184, %v100
    %v186 = vpop.permute.xlu0 %185
    %v188 = vperm.slane %v96, 1
    %vm189 = vcmp.ne.f32.partialorder %v186, %v188
    %v190 = vsel %vm189, %v183, 0.0
    %v191 = vsel %vm140, %v190, 0.0
    %v192 = vrot.slane %v191, 4
    %v193 = vadd.f32 %v191, %v192
    %v194 = vrot.slane %v193, 2
    %v195 = vadd.f32 %v193, %v194
    %v196 = vrot.slane %v195, 1
    %v197 = vadd.f32 %v195, %v196
    %v198 = vadd.f32 %v197, 0.0
    %199 = vset.pattern.permute.xlu0 1
    %200 = vperm.xlu0 %199, %v98
    %v201 = vpop.permute.xlu0 %200
    %v203 = vperm.slane %v201, 0
    %v204 = vmul.f32 %v203, %v198
    %v205 = vadd.f32 %v156, %v204
    %206 = vset.pattern.permute.xlu0 2
    %207 = vperm.xlu0 %206, %v99
    %v208 = vpop.permute.xlu0 %207
    %v210 = vperm.slane %v95, 2
    %v211 = vsub.f32 %v208, %v210
    %v212 = vmax.f32 %v211, -50.0
    %v213 = vmin.f32 %v212, 50.0
    %214 = vset.pattern.permute.xlu0 2
    %215 = vperm.xlu0 %214, %v102
    %v216 = vpop.permute.xlu0 %215
    %v218 = vperm.slane %v97, 2
    %v219 = vsub.f32 %v216, %v218
    %v220 = vmax.f32 %v219, 1e-10
    %v221 = vmin.f32 %v220, 1.0
    %v222 = vmax.f32 %v213, 0.0
    %v223 = vand.u32 2147483647, %v213
    %v224 = vsub.f32 0.0, %v223
    %v225 = vmul.f32 %v224, 1.442695
    %v226 = vpow.pop %v225
    %v227 = vadd.f32 %v226, 1.0
    %v228 = vlog2.pop %v227
    %v229 = vmul.f32 %v228, 0.6931472
    %v230 = vadd.f32 %v222, %v229
    %v231 = vmul.f32 %v221, %v213
    %v232 = vsub.f32 %v230, %v231
    %233 = vset.pattern.permute.xlu0 2
    %234 = vperm.xlu0 %233, %v100
    %v235 = vpop.permute.xlu0 %234
    %v237 = vperm.slane %v96, 2
    %vm238 = vcmp.ne.f32.partialorder %v235, %v237
    %v239 = vsel %vm238, %v232, 0.0
    %v240 = vsel %vm140, %v239, 0.0
    %v241 = vrot.slane %v240, 4
    %v242 = vadd.f32 %v240, %v241
    %v243 = vrot.slane %v242, 2
    %v244 = vadd.f32 %v242, %v243
    %v245 = vrot.slane %v244, 1
    %v246 = vadd.f32 %v244, %v245
    %v247 = vadd.f32 %v246, 0.0
    %248 = vset.pattern.permute.xlu0 2
    %249 = vperm.xlu0 %248, %v98
    %v250 = vpop.permute.xlu0 %249
    %v252 = vperm.slane %v250, 0
    %v253 = vmul.f32 %v252, %v247
    %v254 = vadd.f32 %v205, %v253
    %255 = vset.pattern.permute.xlu0 3
    %256 = vperm.xlu0 %255, %v99
    %v257 = vpop.permute.xlu0 %256
    %v259 = vperm.slane %v95, 3
    %v260 = vsub.f32 %v257, %v259
    %v261 = vmax.f32 %v260, -50.0
    %v262 = vmin.f32 %v261, 50.0
    %263 = vset.pattern.permute.xlu0 3
    %264 = vperm.xlu0 %263, %v102
    %v265 = vpop.permute.xlu0 %264
    %v267 = vperm.slane %v97, 3
    %v268 = vsub.f32 %v265, %v267
    %v269 = vmax.f32 %v268, 1e-10
    %v270 = vmin.f32 %v269, 1.0
    %v271 = vmax.f32 %v262, 0.0
    %v272 = vand.u32 2147483647, %v262
    %v273 = vsub.f32 0.0, %v272
    %v274 = vmul.f32 %v273, 1.442695
    %v275 = vpow.pop %v274
    %v276 = vadd.f32 %v275, 1.0
    %v277 = vlog2.pop %v276
    %v278 = vmul.f32 %v277, 0.6931472
    %v279 = vadd.f32 %v271, %v278
    %v280 = vmul.f32 %v270, %v262
    %v281 = vsub.f32 %v279, %v280
    %282 = vset.pattern.permute.xlu0 3
    %283 = vperm.xlu0 %282, %v100
    %v284 = vpop.permute.xlu0 %283
    %v286 = vperm.slane %v96, 3
    %vm287 = vcmp.ne.f32.partialorder %v284, %v286
    %v288 = vsel %vm287, %v281, 0.0
    %v289 = vsel %vm140, %v288, 0.0
    %v290 = vrot.slane %v289, 4
    %v291 = vadd.f32 %v289, %v290
    %v292 = vrot.slane %v291, 2
    %v293 = vadd.f32 %v291, %v292
    %v294 = vrot.slane %v293, 1
    %v295 = vadd.f32 %v293, %v294
    %v296 = vadd.f32 %v295, 0.0
    %297 = vset.pattern.permute.xlu0 3
    %298 = vperm.xlu0 %297, %v98
    %v299 = vpop.permute.xlu0 %298
    %v301 = vperm.slane %v299, 0
    %v302 = vmul.f32 %v301, %v296
    %v303 = vadd.f32 %v254, %v302
    %p304 = scmp.eq.s32.totalorder %s93, %s94
    %s305 = scalar_select %p304, 1.0, 2.0
    %v306 = vsel %vm140, %v303, 0.0
    %307 = vadd.xlane.f32.xlu0 %v306
    %v308 = vpop.xlane.xlu0 %307
    %v309 = vstv %s305
    %v310 = vmul.f32 %v308, %v309
    %vm311 = vcmask 0
    %312 = vst.msk [vmem:[#allocation5] sm:$0x1] %vm311, %v310
    // Predicated region
    $region22: #{tpu_custom_call.1} parent=1 // pred_check
      _
    $region23: #{tpu_custom_call.1} parent=1 // pred_check_branch
      %314 = sbr.rel (0) target = $region25
    $region24: #{tpu_custom_call.1} parent=1 // pred_region
      %316 = vsyncadd [#allocation6], 0
      %s318 = sshll.u32 [#allocation5], 4
      %s319 = int_to_ptr.vmem [resolvable:$true] %s318
      %s320 = sshll.u32 %s7, 4
      %s321 = int_to_ptr.hbm [resolvable:$true] %s320
      %323 = dma.vmem_to_hbm [thread:$0]  %s319, 16, %s321, [#allocation6]
    $region25: #{tpu_custom_call.1} parent=1 // pred_fallthru
      _
    // Predicated region
    $region26: #{tpu_custom_call.1} parent=1 // pred_check
      _
    $region27: #{tpu_custom_call.1} parent=1 // pred_check_branch
      %325 = sbr.rel (0) target = $region29
    $region28: #{tpu_custom_call.1} parent=1 // pred_region
      %327 = dma.done [#allocation6], 16
    $region29: #{tpu_custom_call.1} parent=1 // pred_fallthru
      _
    %328 = vsyncpa [#allocation6], 1

</llo_original>
